<compile_context>
chip_gen: v6e
topology: v6e:2x2x1
jax: 0.10.0
libtpu: 0.0.40
codegen_flags: <defaults>
</compile_context>

<pallas_src>
import math
import functools

import jax
import jax.numpy as jnp
from jax import lax
from jax.experimental import pallas as pl
from jax.experimental.pallas import tpu as pltpu


# Budget for double-buffered resident K+V blocks (2 arrays x 2 buffers).
_KV_RESIDENT_BYTES = 8 * 1024 * 1024


@functools.lru_cache(maxsize=1)
def _vmem_limit():
    """Scoped-VMEM budget: 3/4 of physical VMEM, capped at 96 MiB.

    -> 96 MiB on v5e/v6e (128 MiB physical), 48 MiB on v7x (64 MiB per TC).
    Falls back to 48 MiB (safe on every generation) if the query fails.
    """
    try:
        cap = int(pltpu.get_tpu_info().vmem_capacity_bytes)
        return min(cap * 3 // 4, 96 * 1024 * 1024)
    except Exception:
        return 48 * 1024 * 1024


def _round_up(x, m):
    return (x + m - 1) // m * m


def _pick_tile(dim, preferred, step):
    """Largest divisor of `dim` that is <= `preferred` and a multiple of `step`.
    `dim` must itself be a multiple of `step`."""
    t = min(dim, preferred)
    t -= t % step
    while dim % t:
        t -= step
    return t


def _attn_tiles(S, compute_dtype, has_int8_mask):
    """(TQ, TK, S_p) respecting dtype-specific sublane minimums."""
    sub = 16 if jnp.dtype(compute_dtype) == jnp.dtype(jnp.bfloat16) else 8
    if has_int8_mask:
        sub = 32                      # int8 mask blocks want >=32 sublanes
    TQ = 128 if S >= 128 else _round_up(S, sub)
    S_p = _round_up(S, TQ)
    if S_p % 256 == 0:
        TK = 256                      # fills the 256-wide MXU on v6e/v7x
    elif S_p % 128 == 0:
        TK = 128
    else:
        TK = TQ
    return TQ, TK, S_p


# ----------------------------------------------------------------------------
# Fused Q/K/V projection:  Y[g] = X[g] @ W[g] + b[g]   for g in {q, k, v}
# Weight is held fully resident in VMEM (no K-reduction grid axis); for this
# module d_model is small so a single (K, N) weight block is a few 10s of KiB.
# ----------------------------------------------------------------------------
def _qkv_kernel(x_ref, w_ref, b_ref, o_ref):
    y = jnp.dot(x_ref[0], w_ref[0], preferred_element_type=jnp.float32)
    o_ref[0] = (y + b_ref[0].astype(jnp.float32)).astype(o_ref.dtype)


def _qkv_projection(x3, w3, b3, *, out_dtype, sublane):
    """x3: (3, M, K), w3: (3, K, N), b3: (3, 1, N).  Returns (3, M, N)."""
    G, M, K = x3.shape
    N = w3.shape[-1]
    tm = _pick_tile(M, 512, sublane)
    tn = N if N <= 1024 else _pick_tile(N, 512, 128)
    grid = (G, M // tm, N // tn)

    return pl.pallas_call(
        _qkv_kernel,
        out_shape=jax.ShapeDtypeStruct((G, M, N), out_dtype),
        grid_spec=pltpu.PrefetchScalarGridSpec(
            num_scalar_prefetch=0,
            grid=grid,
            in_specs=[pl.BlockSpec((1, tm, K), lambda g, i, j: (g, i, 0)),
                      pl.BlockSpec((1, K, tn), lambda g, i, j: (g, 0, j)),
                      pl.BlockSpec((1, 1, tn), lambda g, i, j: (g, 0, j))],
            out_specs=pl.BlockSpec((1, tm, tn), lambda g, i, j: (g, i, j))),
        compiler_params=pltpu.CompilerParams(
            dimension_semantics=("parallel", "parallel", "parallel"),
            vmem_limit_bytes=_vmem_limit()),
    )(x3, w3, b3)


# ----------------------------------------------------------------------------
# Flash-style attention (online softmax over kv tiles) with the output
# projection fused into the epilogue.
# ----------------------------------------------------------------------------
def _flash_attn_kernel(*refs, scale, seq_len, q_tile, kv_tile, padded,
                       has_mask, is_causal, kv_resident, approx_recip):
    if has_mask:
        (q_ref, k_ref, v_ref, mask_ref, wo_ref, bo_ref,
         o_ref, m_ref, l_ref, acc_ref) = refs
    else:
        (q_ref, k_ref, v_ref, wo_ref, bo_ref,
         o_ref, m_ref, l_ref, acc_ref) = refs
        mask_ref = None

    qi = pl.program_id(1)
    ki = pl.program_id(2)

    @pl.when(ki == 0)
    def _init():
        m_ref[...] = jnp.full(m_ref.shape, -jnp.inf, dtype=m_ref.dtype)
        l_ref[...] = jnp.zeros(l_ref.shape, dtype=l_ref.dtype)
        acc_ref[...] = jnp.zeros(acc_ref.shape, dtype=acc_ref.dtype)

    def _step():
        # Fold the softmax scale into q once per q-tile (stays compute dtype).
        q = q_ref[0] * scale                              # (TQ, Dp)
        if kv_resident:
            start = pl.multiple_of(ki * kv_tile, kv_tile)
            k = k_ref[0, pl.ds(start, kv_tile), :]        # (TK, Dp)
            v = v_ref[0, pl.ds(start, kv_tile), :]
        else:
            k = k_ref[0]
            v = v_ref[0]

        # scores = (q * scale) @ k^T — contract last dims, no explicit .T.
        s = lax.dot_general(q, k, (((1,), (1,)), ((), ())),
                            preferred_element_type=jnp.float32)

        if has_mask:
            s = jnp.where(mask_ref[0] == 0, jnp.float32(-1e9), s)
        if is_causal:
            q_idx = qi * q_tile + lax.broadcasted_iota(jnp.int32, s.shape, 0)
            kv_idx = ki * kv_tile + lax.broadcasted_iota(jnp.int32, s.shape, 1)
            s = jnp.where(kv_idx > q_idx, jnp.float32(-1e9), s)
        if padded:
            # kv positions beyond the true sequence length contribute nothing.
            kv_idx = ki * kv_tile + lax.broadcasted_iota(jnp.int32, s.shape, 1)
            s = jnp.where(kv_idx < seq_len, s, -jnp.inf)

        # Online (numerically stable) softmax update, all math in f32.
        m_prev = m_ref[...]                                   # (TQ, 1)
        m_new = jnp.maximum(m_prev, jnp.max(s, axis=-1, keepdims=True))
        alpha = jnp.exp(m_prev - m_new)
        p = jnp.exp(s - m_new)                                # (TQ, TK)
        l_ref[...] = alpha * l_ref[...] + jnp.sum(p, axis=-1, keepdims=True)
        acc_ref[...] = alpha * acc_ref[...] + jnp.dot(
            p.astype(v.dtype), v, preferred_element_type=jnp.float32)
        m_ref[...] = m_new

    if is_causal:
        # Skip kv tiles that lie entirely above the diagonal (zero contribution).
        @pl.when(ki * kv_tile <= qi * q_tile + (q_tile - 1))
        def _():
            _step()
    else:
        _step()

    @pl.when(ki == pl.num_programs(2) - 1)
    def _finalize():
        inv_l = pl.reciprocal(l_ref[...], approx=approx_recip)
        attn = (acc_ref[...] * inv_l).astype(wo_ref.dtype)    # (TQ, Dp)
        # Fused output projection (Wo resident in VMEM across the whole grid).
        out = jnp.dot(attn, wo_ref[...], preferred_element_type=jnp.float32)
        o_ref[0] = (out + bo_ref[...].astype(jnp.float32)).astype(o_ref.dtype)


def _flash_attention(qp, kp, vp, mask_i8, wo_p, bo_p, *, scale, seq_len,
                     q_tile, kv_tile, is_causal, out_dtype, approx_recip):
    B, S_p, Dp = qp.shape
    n_q = S_p // q_tile
    n_kv = S_p // kv_tile
    has_mask = mask_i8 is not None

    # Keep K/V VMEM-resident per batch when the double-buffered blocks are
    # small enough; otherwise fall back to per-kv-tile streaming.
    itemsize = jnp.dtype(qp.dtype).itemsize
    kv_resident = (4 * S_p * Dp * itemsize) <= _KV_RESIDENT_BYTES

    kernel = functools.partial(
        _flash_attn_kernel, scale=scale, seq_len=seq_len,
        q_tile=q_tile, kv_tile=kv_tile, padded=(S_p != seq_len),
        has_mask=has_mask, is_causal=is_causal,
        kv_resident=kv_resident, approx_recip=approx_recip)

    q_spec = pl.BlockSpec((1, q_tile, Dp), lambda b, qi, ki: (b, qi, 0))
    if kv_resident:
        # Block index only changes with b -> K/V DMA'd once per batch.
        kv_spec = pl.BlockSpec((1, S_p, Dp), lambda b, qi, ki: (b, 0, 0))
    else:
        kv_spec = pl.BlockSpec((1, kv_tile, Dp), lambda b, qi, ki: (b, ki, 0))

    in_specs = [q_spec, kv_spec, kv_spec]
    inputs = [qp, kp, vp]
    if has_mask:
        if mask_i8.shape[0] == 1:      # batch-broadcast mask: read once per tile
            m_spec = pl.BlockSpec((1, q_tile, kv_tile),
                                  lambda b, qi, ki: (0, qi, ki))
        else:
            m_spec = pl.BlockSpec((1, q_tile, kv_tile),
                                  lambda b, qi, ki: (b, qi, ki))
        in_specs.append(m_spec)
        inputs.append(mask_i8)
    # Fused output-projection weight/bias: resident across the whole grid.
    in_specs += [pl.BlockSpec((Dp, Dp), lambda b, qi, ki: (0, 0)),
                 pl.BlockSpec((1, Dp), lambda b, qi, ki: (0, 0))]
    inputs += [wo_p, bo_p]

    return pl.pallas_call(
        kernel,
        out_shape=jax.ShapeDtypeStruct((B, S_p, Dp), out_dtype),
        grid_spec=pltpu.PrefetchScalarGridSpec(
            num_scalar_prefetch=0,
            grid=(B, n_q, n_kv),
            in_specs=in_specs,
            out_specs=pl.BlockSpec((1, q_tile, Dp), lambda b, qi, ki: (b, qi, 0)),
            scratch_shapes=[pltpu.VMEM((q_tile, 1), jnp.float32),
                            pltpu.VMEM((q_tile, 1), jnp.float32),
                            pltpu.VMEM((q_tile, Dp), jnp.float32)]),
        # (b, qi) parallel -> megacore sharding on v7x (needs B * n_q >= 2);
        # ki carries the online-softmax accumulator -> arbitrary.
        compiler_params=pltpu.CompilerParams(
            dimension_semantics=("parallel", "parallel", "arbitrary"),
            vmem_limit_bytes=_vmem_limit()),
    )(*inputs)


# ----------------------------------------------------------------------------
# Public wrapper (matches SingleHeadAttention.forward semantics, eval mode)
# ----------------------------------------------------------------------------
def single_head_attention(q, k, v, params, mask=None, is_causal=False,
                          compute_dtype=jnp.float32):
    """q, k, v: (B, S, D).  mask: optional (S, S) / (1, S, S) / (B, S, S)
    (0 => masked).  is_causal=True applies a causal mask generated in-kernel
    (any explicit `mask` is ignored in that case).  Weights in `params` are
    stored pre-transposed (D_in, D_out); biases (1, D)."""
    B, S, D = q.shape
    out_dtype = q.dtype
    compute_dtype = jnp.dtype(compute_dtype)
    wq, bq, wk, bk, wv, bv, wo, bo = params

    Dp = _round_up(D, 128)                               # lane-dense, MXU aligned
    has_mask = (mask is not None) and (not is_causal)
    TQ, TK, S_p = _attn_tiles(S, compute_dtype, has_mask)

    def pad_act(x):
        return jnp.pad(x, ((0, 0), (0, S_p - S), (0, Dp - D))).astype(compute_dtype)

    def pad_w(w):
        return jnp.pad(w, ((0, Dp - D), (0, Dp - D))).astype(compute_dtype)

    def pad_b(b):
        return jnp.pad(b, ((0, 0), (0, Dp - D))).astype(jnp.float32)

    # --- Fused Q/K/V projections: one pallas_call over a stacked leading axis.
    M = B * S_p
    x3 = jnp.stack([pad_act(q).reshape(M, Dp),
                    pad_act(k).reshape(M, Dp),
                    pad_act(v).reshape(M, Dp)])          # (3, M, Dp)
    w3 = jnp.stack([pad_w(wq), pad_w(wk), pad_w(wv)])    # (3, Dp, Dp)
    b3 = jnp.stack([pad_b(bq), pad_b(bk), pad_b(bv)])    # (3, 1, Dp)
    lin_sub = 16 if compute_dtype == jnp.dtype(jnp.bfloat16) else 8
    qkv = _qkv_projection(x3, w3, b3, out_dtype=compute_dtype, sublane=lin_sub)
    qp = qkv[0].reshape(B, S_p, Dp)
    kp = qkv[1].reshape(B, S_p, Dp)
    vp = qkv[2].reshape(B, S_p, Dp)

    # --- Optional user mask, streamed as int8 tiles (batch-broadcast aware).
    mask_i8 = None
    if has_mask:
        m = jnp.asarray(mask)
        if m.ndim == 2:
            m = m[None]
        mb = 1 if m.shape[0] == 1 else B
        m = jnp.broadcast_to(m != 0, (mb, S, S)).astype(jnp.int8)
        mask_i8 = jnp.pad(m, ((0, 0), (0, S_p - S), (0, S_p - S)))

    scale = 1.0 / math.sqrt(D)   # PyTorch passes d_model as d_attention
    out = _flash_attention(
        qp, kp, vp, mask_i8, pad_w(wo), pad_b(bo),
        scale=scale, seq_len=S, q_tile=TQ, kv_tile=TK, is_causal=is_causal,
        out_dtype=out_dtype,
        approx_recip=(compute_dtype == jnp.dtype(jnp.bfloat16)))
    return out[:, :S, :D]


def init_params(key, d_model):
    """nn.Linear(d_model, d_model)-style init.  PyTorch stores weight as
    (out, in); we store the transpose (in, out) so kernels compute x @ W + b."""
    keys = jax.random.split(key, 8)
    bound = 1.0 / math.sqrt(d_model)

    def lin(kw, kb):
        w = jax.random.uniform(kw, (d_model, d_model), jnp.float32, -bound, bound)
        b = jax.random.uniform(kb, (1, d_model), jnp.float32, -bound, bound)
        return w, b

    wq, bq = lin(keys[0], keys[1])
    wk, bk = lin(keys[2], keys[3])
    wv, bv = lin(keys[4], keys[5])
    wo, bo = lin(keys[6], keys[7])
    return (wq, bq, wk, bk, wv, bv, wo, bo)


def _reference(q, k, v, params, mask=None):
    wq, bq, wk, bk, wv, bv, wo, bo = params
    d = q.shape[-1]
    qp = q @ wq + bq
    kp = k @ wk + bk
    vp = v @ wv + bv
    scores = (qp @ jnp.swapaxes(kp, -2, -1)) / math.sqrt(d)
    if mask is not None:
        scores = jnp.where(mask == 0, -1e9, scores)
    p = jax.nn.softmax(scores, axis=-1)
    return (p @ vp) @ wo + bo


if __name__ == "__main__":
    B, S, D = 2, 8, 32
    key = jax.random.PRNGKey(0)
    kq, kk, kv_, kparam, kq2, kk2, kv2, kq3, kk3, kv3 = jax.random.split(key, 10)

    q = jax.random.normal(kq, (B, S, D), dtype=jnp.float32)
    k = jax.random.normal(kk, (B, S, D), dtype=jnp.float32)
    v = jax.random.normal(kv_, (B, S, D), dtype=jnp.float32)
    params = init_params(kparam, D)

    # 1) f32, no mask (zero mask HBM traffic path)
    out = jax.block_until_ready(single_head_attention(q, k, v, params))
    ref = _reference(q, k, v, params)
    assert out.shape == (B, S, D)
    assert jnp.allclose(out, ref, atol=1e-2, rtol=1e-2), \
        float(jnp.max(jnp.abs(out - ref)))

    # 2) f32, explicit causal mask (B, S, S): int8 streamed-mask path
    causal = jnp.broadcast_to(jnp.tril(jnp.ones((S, S), jnp.float32)), (B, S, S))
    out_m = jax.block_until_ready(single_head_attention(q, k, v, params, mask=causal))
    ref_m = _reference(q, k, v, params, mask=causal)
    assert jnp.allclose(out_m, ref_m, atol=1e-2, rtol=1e-2), \
        float(jnp.max(jnp.abs(out_m - ref_m)))

    # 2b) same mask passed batch-broadcast as (S, S)
    out_mb = jax.block_until_ready(
        single_head_attention(q, k, v, params, mask=causal[0]))
    assert jnp.allclose(out_mb, ref_m, atol=1e-2, rtol=1e-2), \
        float(jnp.max(jnp.abs(out_mb - ref_m)))

    # 3) is_causal fast path (mask generated in-kernel, no mask HBM traffic)
    out_c = jax.block_until_ready(
        single_head_attention(q, k, v, params, is_causal=True))
    assert jnp.allclose(out_c, ref_m, atol=1e-2, rtol=1e-2), \
        float(jnp.max(jnp.abs(out_c - ref_m)))

    # 4) bf16 MXU operands (f32 accumulation) — looser tolerance
    out_bf = jax.block_until_ready(
        single_head_attention(q, k, v, params, compute_dtype=jnp.bfloat16))
    assert jnp.allclose(out_bf, ref, atol=1e-1, rtol=1e-1), \
        float(jnp.max(jnp.abs(out_bf - ref)))

    # 5) non-tile-aligned sequence length (exercises in-kernel kv padding mask)
    S2 = 12
    q2 = jax.random.normal(kq2, (B, S2, D), dtype=jnp.float32)
    k2 = jax.random.normal(kk2, (B, S2, D), dtype=jnp.float32)
    v2 = jax.random.normal(kv2, (B, S2, D), dtype=jnp.float32)
    out2 = jax.block_until_ready(single_head_attention(q2, k2, v2, params))
    ref2 = _reference(q2, k2, v2, params)
    assert out2.shape == (B, S2, D)
    assert jnp.allclose(out2, ref2, atol=1e-2, rtol=1e-2), \
        float(jnp.max(jnp.abs(out2 - ref2)))

    # 6) multi-tile causal (exercises resident-KV in-kernel slicing, the
    #    above-diagonal kv-tile skip, and padding of a non-aligned sequence)
    S3 = 300
    q3 = jax.random.normal(kq3, (B, S3, D), dtype=jnp.float32)
    k3 = jax.random.normal(kk3, (B, S3, D), dtype=jnp.float32)
    v3 = jax.random.normal(kv3, (B, S3, D), dtype=jnp.float32)
    out3 = jax.block_until_ready(
        single_head_attention(q3, k3, v3, params, is_causal=True))
    ref3 = _reference(q3, k3, v3, params, mask=jnp.tril(jnp.ones((S3, S3))))
    assert out3.shape == (B, S3, D)
    assert jnp.allclose(out3, ref3, atol=1e-2, rtol=1e-2), \
        float(jnp.max(jnp.abs(out3 - ref3)))

    print("KERNEL_OK")
</pallas_src>

<mosaic_0001>
module attributes {stable_mosaic.version = 11 : i64} {
  func.func @_qkv_kernel(%arg0: i32, %arg1: i32, %arg2: i32, %arg3: memref<1x16x128xf32, #tpu.memory_space<vmem>>, %arg4: memref<1x128x128xf32, #tpu.memory_space<vmem>>, %arg5: memref<1x1x128xf32, #tpu.memory_space<vmem>>, %arg6: memref<1x16x128xf32, #tpu.memory_space<vmem>>) attributes {dimension_semantics = [#tpu.dimension_semantics<parallel>, #tpu.dimension_semantics<parallel>, #tpu.dimension_semantics<parallel>], iteration_bounds = array<i64: 3, 1, 1>, scalar_prefetch = 0 : i64, scratch_operands = 0 : i64, tpu.core_type = #tpu.core_type<tc>, window_params = [{transform_indices = @transform_0, window_bounds = array<i64: 1, 16, 128>}, {transform_indices = @transform_1, window_bounds = array<i64: 1, 128, 128>}, {transform_indices = @transform_2, window_bounds = array<i64: 1, 1, 128>}, {transform_indices = @transform_3, window_bounds = array<i64: 1, 16, 128>}]} {
    %c0 = arith.constant 0 : index
    %c0_0 = arith.constant 0 : index
    %c0_1 = arith.constant 0 : index
    %0 = vector.load %arg3[%c0, %c0_0, %c0_1] : memref<1x16x128xf32, #tpu.memory_space<vmem>>, vector<1x16x128xf32>
    %1 = vector.shape_cast %0 : vector<1x16x128xf32> to vector<16x128xf32>
    %c0_2 = arith.constant 0 : index
    %c0_3 = arith.constant 0 : index
    %c0_4 = arith.constant 0 : index
    %2 = vector.load %arg4[%c0_2, %c0_3, %c0_4] : memref<1x128x128xf32, #tpu.memory_space<vmem>>, vector<1x128x128xf32>
    %3 = vector.shape_cast %2 : vector<1x128x128xf32> to vector<128x128xf32>
    %cst = arith.constant dense<0.000000e+00> : vector<16x128xf32>
    %4 = tpu.matmul %1, %3, %cst {dimension_numbers = #tpu.dot_dimension_numbers<[1], [0], [0], [1], [0, 0, 1, 1], [], []>} : vector<16x128xf32>, vector<128x128xf32>, vector<16x128xf32> -> vector<16x128xf32>
    %c0_5 = arith.constant 0 : index
    %c0_6 = arith.constant 0 : index
    %c0_7 = arith.constant 0 : index
    %5 = vector.load %arg5[%c0_5, %c0_6, %c0_7] : memref<1x1x128xf32, #tpu.memory_space<vmem>>, vector<1x1x128xf32>
    %6 = vector.shape_cast %5 : vector<1x1x128xf32> to vector<1x128xf32>
    %7 = vector.broadcast %6 : vector<1x128xf32> to vector<16x128xf32>
    %8 = arith.addf %4, %7 : vector<16x128xf32>
    %c0_8 = arith.constant 0 : index
    %c0_9 = arith.constant 0 : index
    %c0_10 = arith.constant 0 : index
    %9 = vector.load %arg6[%c0_8, %c0_9, %c0_10] : memref<1x16x128xf32, #tpu.memory_space<vmem>>, vector<1x16x128xf32>
    %10 = vector.shape_cast %9 : vector<1x16x128xf32> to vector<16x128xf32>
    %11 = vector.shape_cast %8 : vector<16x128xf32> to vector<1x16x128xf32>
    tpu.vector_store %arg6[%c0_8, %c0_9, %c0_10], %11 {strides = array<i32>} : memref<1x16x128xf32, #tpu.memory_space<vmem>>, vector<1x16x128xf32>,
    return
  }
  func.func @transform_0(%arg0: i32, %arg1: i32, %arg2: i32) -> (i32, i32, i32) {
    %c0_i32 = arith.constant 0 : i32
    %c0_i32_0 = arith.constant 0 : i32
    return %arg0, %arg1, %c0_i32 : i32, i32, i32
  }
  func.func @transform_1(%arg0: i32, %arg1: i32, %arg2: i32) -> (i32, i32, i32) {
    %c0_i32 = arith.constant 0 : i32
    %c0_i32_0 = arith.constant 0 : i32
    return %arg0, %c0_i32, %arg2 : i32, i32, i32
  }
  func.func @transform_2(%arg0: i32, %arg1: i32, %arg2: i32) -> (i32, i32, i32) {
    %c0_i32 = arith.constant 0 : i32
    %c0_i32_0 = arith.constant 0 : i32
    return %arg0, %c0_i32, %arg2 : i32, i32, i32
  }
  func.func @transform_3(%arg0: i32, %arg1: i32, %arg2: i32) -> (i32, i32, i32) {
    %c0_i32 = arith.constant 0 : i32
    return %arg0, %arg1, %arg2 : i32, i32, i32
  }
}

</mosaic_0001>

<llo_original>
// kernel: tpu_custom_call.1
$region0: #{tpu_custom_call.1}
  #allocation0 [shape = 'u32[]', space=smem, size = 0x4, offset = 0x4, fixed_abs, tag = 'smem constant byte address 0x4 - core index']
  #allocation1 [shape = 'u32[144,128]{1,0:T(1,128)}', space=vmem, size = 0x12000, scoped, tag = 'internal scratch']
  %s0 = inlined_call_operand.hbm [shape: f32[3,16,128], index: 0, kind: input, shape index: {}]
  %s1 = inlined_call_operand.hbm [shape: f32[3,128,128], index: 1, kind: input, shape index: {}]
  %s2 = inlined_call_operand.vmem [shape: f32[3,1,128], index: 2, kind: input, shape index: {}]
  %s3 = inlined_call_operand.hbm [shape: f32[3,16,128], index: 3, kind: output, shape index: {}]
  %s4 = sld [smem:[#allocation0]]
  $region53: #{tpu_custom_call.1} parent=0
    _
  %s6 = ssub.s32 1, %s4
  %s7 = scalar_select 0, %s6, %s4
  $region1: #{tpu_custom_call.1} parent=0
    #allocation2 [shape = 'u8[16384]{0}', space=vmem, size = 0x4000, scoped, tag = 'input window, operand 0']
    #allocation3 [shape = 's32[2]{0}', space=sflag, size = 0x8, scoped, tag = 'scoped memory for tpu_custom_call.1']
    #allocation4 [shape = 's32[2]{0}', space=sflag, size = 0x8, scoped, tag = 'scoped memory for tpu_custom_call.1']
    #allocation5 [shape = 'u8[131072]{0}', space=vmem, size = 0x20000, scoped, tag = 'input window, operand 1']
    #allocation6 [shape = 's32[2]{0}', space=sflag, size = 0x8, scoped, tag = 'scoped memory for tpu_custom_call.1']
    #allocation7 [shape = 'u8[16384]{0}', space=vmem, size = 0x4000, scoped, tag = 'output window, operand 0']
    %8 = vsyncpa [#allocation3], 0
    %s9 = scalar_lea.sflag [#allocation3], 1
    %10 = vsyncpa %s9, 0
    %11 = vsyncpa [#allocation6], 0
    %s12 = scalar_lea.sflag [#allocation6], 1
    %13 = vsyncpa %s12, 0
    %14 = vsyncpa [#allocation4], 0
    %s15 = scalar_lea.sflag [#allocation4], 1
    %16 = vsyncpa %s15, 0
    loop: start=0, step=1, limit=5
    $region2: #{tpu_custom_call.1} parent=1 // loop_pre_header
      _
    $region3: #{tpu_custom_call.1} parent=1 // loop_header
      %s18 = sphi 0, %s22
      %p19 = scmp.ge.s32.totalorder %s18, 5
      %s25 = sphi 0, %s44
      %s26 = sphi 0, %s40
      %s27 = sphi 0, %s36
      %s28 = sphi 0, %s25
      %s29 = sphi 0, %s26
      %s30 = sphi 0, %s27
      %s31 = sphi 0, %s28
      %s32 = sphi 0, %s29
      %s33 = sphi 0, %s30
      %s49 = sphi 0, %s51
      %s52 = sphi 0, %s49
      %s53 = sphi 0, %s52
      %s69 = sphi 0, %s53
      %s77 = sphi 0, %s79
      %s80 = sphi 0, %s77
      %s81 = sphi 0, %s80
      %s97 = sphi 0, %s81
      %s105 = sphi 0, %s107
      %s108 = sphi 0, %s105
      %s109 = sphi 0, %s108
      %s125 = sphi 0, %s109
      %s135 = sphi 0, %s137
      %s138 = sphi 0, %s135
      %s139 = sphi 0, %s138
      %s155 = sphi 0, %s139
    $region4: #{tpu_custom_call.1} parent=1 // loop_header_branch
      %21 = sbr.rel (%p19) target = $region8
    $region5: #{tpu_custom_call.1} parent=1 // loop_body
      %s23 = ssub.s32 %s18, 1
      %s24 = ssub.s32 %s18, 2
      %s34 = sadd.s32 1, %s27
      %p35 = scmp.ge.s32.totalorder %s34, 1
      %s36 = scalar_select %p35, 0, %s34
      %s37 = sadd.s32 1, %s26
      %s38 = scalar_select %p35, %s37, %s26
      %p39 = scmp.ge.s32.totalorder %s38, 1
      %s40 = scalar_select %p39, 0, %s38
      %s41 = sadd.s32 1, %s25
      %s42 = scalar_select %p39, %s41, %s25
      %p43 = scmp.ge.s32.totalorder %s42, 3
      %s44 = scalar_select %p43, 0, %s42
      %s45 = ssub.s32 %s25, %s44
      %s46 = ssub.s32 %s26, %s40
      %s47 = sor.u32 %s45, %s46
      %p48 = scmp.eq.s32.totalorder %s47, 0
      %s50 = sadd.s32 %s49, 1
      %s51 = scalar_select %p48, %s49, %s50
      %p54 = pneg %p48
      %p55 = scmp.eq.s32.totalorder %s18, 2
      %p56 = por %p54, %p55
      %p57 = scmp.ne.s32.totalorder %s49, %s52
      %p58 = scmp.eq.s32.totalorder %s18, 0
      %p59 = por %p57, %p58
      %p60 = scmp.ne.s32.totalorder %s49, %s52
      %p61 = scmp.eq.s32.totalorder %s23, 2
      %p62 = por %p60, %p61
      %p63 = scmp.ne.s32.totalorder %s52, %s53
      %p64 = scmp.eq.s32.totalorder %s23, 0
      %p65 = por %p63, %p64
      %p66 = scmp.ne.s32.totalorder %s52, %s53
      %p67 = scmp.eq.s32.totalorder %s24, 2
      %p68 = por %p66, %p67
      %p70 = scmp.ne.s32.totalorder %s53, %s69
      %p71 = scmp.eq.s32.totalorder %s24, 0
      %p72 = por %p70, %p71
      %s73 = ssub.s32 %s25, %s44
      %s74 = ssub.s32 %s27, %s36
      %s75 = sor.u32 %s73, %s74
      %p76 = scmp.eq.s32.totalorder %s75, 0
      %s78 = sadd.s32 %s77, 1
      %s79 = scalar_select %p76, %s77, %s78
      %p82 = pneg %p76
      %p83 = scmp.eq.s32.totalorder %s18, 2
      %p84 = por %p82, %p83
      %p85 = scmp.ne.s32.totalorder %s77, %s80
      %p86 = scmp.eq.s32.totalorder %s18, 0
      %p87 = por %p85, %p86
      %p88 = scmp.ne.s32.totalorder %s77, %s80
      %p89 = scmp.eq.s32.totalorder %s23, 2
      %p90 = por %p88, %p89
      %p91 = scmp.ne.s32.totalorder %s80, %s81
      %p92 = scmp.eq.s32.totalorder %s23, 0
      %p93 = por %p91, %p92
      %p94 = scmp.ne.s32.totalorder %s80, %s81
      %p95 = scmp.eq.s32.totalorder %s24, 2
      %p96 = por %p94, %p95
      %p98 = scmp.ne.s32.totalorder %s81, %s97
      %p99 = scmp.eq.s32.totalorder %s24, 0
      %p100 = por %p98, %p99
      %s101 = ssub.s32 %s25, %s44
      %s102 = ssub.s32 %s27, %s36
      %s103 = sor.u32 %s101, %s102
      %p104 = scmp.eq.s32.totalorder %s103, 0
      %s106 = sadd.s32 %s105, 1
      %s107 = scalar_select %p104, %s105, %s106
      %p110 = pneg %p104
      %p111 = scmp.eq.s32.totalorder %s18, 2
      %p112 = por %p110, %p111
      %p113 = scmp.ne.s32.totalorder %s105, %s108
      %p114 = scmp.eq.s32.totalorder %s18, 0
      %p115 = por %p113, %p114
      %p116 = scmp.ne.s32.totalorder %s105, %s108
      %p117 = scmp.eq.s32.totalorder %s23, 2
      %p118 = por %p116, %p117
      %p119 = scmp.ne.s32.totalorder %s108, %s109
      %p120 = scmp.eq.s32.totalorder %s23, 0
      %p121 = por %p119, %p120
      %p122 = scmp.ne.s32.totalorder %s108, %s109
      %p123 = scmp.eq.s32.totalorder %s24, 2
      %p124 = por %p122, %p123
      %p126 = scmp.ne.s32.totalorder %s109, %s125
      %p127 = scmp.eq.s32.totalorder %s24, 0
      %p128 = por %p126, %p127
      %s129 = ssub.s32 %s25, %s44
      %s130 = ssub.s32 %s26, %s40
      %s131 = sor.u32 %s129, %s130
      %s132 = ssub.s32 %s27, %s36
      %s133 = sor.u32 %s131, %s132
      %p134 = scmp.eq.s32.totalorder %s133, 0
      %s136 = sadd.s32 %s135, 1
      %s137 = scalar_select %p134, %s135, %s136
      %p140 = pneg %p134
      %p141 = scmp.eq.s32.totalorder %s18, 2
      %p142 = por %p140, %p141
      %p143 = scmp.ne.s32.totalorder %s135, %s138
      %p144 = scmp.eq.s32.totalorder %s18, 0
      %p145 = por %p143, %p144
      %p146 = scmp.ne.s32.totalorder %s135, %s138
      %p147 = scmp.eq.s32.totalorder %s23, 2
      %p148 = por %p146, %p147
      %p149 = scmp.ne.s32.totalorder %s138, %s139
      %p150 = scmp.eq.s32.totalorder %s23, 0
      %p151 = por %p149, %p150
      %p152 = scmp.ne.s32.totalorder %s138, %s139
      %p153 = scmp.eq.s32.totalorder %s24, 2
      %p154 = por %p152, %p153
      %p156 = scmp.ne.s32.totalorder %s139, %s155
      %p157 = scmp.eq.s32.totalorder %s24, 0
      %p158 = por %p156, %p157
      %p159 = scmp.le.s32.totalorder 1, %s18
      %p160 = scmp.lt.s32.totalorder %s18, 4
      %p161 = pnand %p159, %p160
      %p162 = pneg %p161
      // Predicated region
      $region9: #{tpu_custom_call.1} parent=5 // pred_check
        _
      $region10: #{tpu_custom_call.1} parent=5 // pred_check_branch
        %164 = sbr.rel (%p161) target = $region12
      $region11: #{tpu_custom_call.1} parent=5 // pred_region
        %s165 = ssub.s32 %s18, 1
      $region12: #{tpu_custom_call.1} parent=5 // pred_fallthru
        _
      %p166 = scmp.lt.s32.totalorder %s18, 3
      // Predicated region
      $region13: #{tpu_custom_call.1} parent=5 // pred_check
        %p167 = pneg %p166
      $region14: #{tpu_custom_call.1} parent=5 // pred_check_branch
        %169 = sbr.rel (%p167) target = $region16
      $region15: #{tpu_custom_call.1} parent=5 // pred_region
        // Predicated region
        $region17: #{tpu_custom_call.1} parent=15 // pred_check
          %p170 = pneg %p59
        $region18: #{tpu_custom_call.1} parent=15 // pred_check_branch
          %172 = sbr.rel (%p170) target = $region20
        $region19: #{tpu_custom_call.1} parent=15 // pred_region
          %s173 = sand.u32 %s49, 1
          %s174 = scalar_lea.sflag [#allocation3], %s173
          %s175 = sand.u32 %s49, 1
          %s176 = smul.addr %s175, 16
          %s177 = scalar_lea.vmem [#allocation2], %s176
          %s178 = smul.u32 2, %s26
          %s180 = ssub.s32 256, 256
          %181 = vsyncadd %s174, %s180
          %s182 = smul.addr %s25, 2
          %s183 = sadd.s32 %s178, %s182
          %s184 = smul.addr %s183, 128
          %s185 = scalar_lea.hbm %s0, %s184
          %s186 = sshll.u32 %s177, 4
          %s187 = int_to_ptr.vmem [resolvable:$true] %s186
          %192 = dma.hbm_to_vmem [thread:$0]  %s185, 256, %s187, %s174, 128, 128, 8
        $region20: #{tpu_custom_call.1} parent=15 // pred_fallthru
          _
        // Predicated region
        $region21: #{tpu_custom_call.1} parent=15 // pred_check
          %p193 = pneg %p87
        $region22: #{tpu_custom_call.1} parent=15 // pred_check_branch
          %195 = sbr.rel (%p193) target = $region24
        $region23: #{tpu_custom_call.1} parent=15 // pred_region
          %s196 = sand.u32 %s77, 1
          %s197 = scalar_lea.sflag [#allocation6], %s196
          %s198 = sand.u32 %s77, 1
          %s199 = smul.addr %s198, 128
          %s200 = scalar_lea.vmem [#allocation5], %s199
          %s202 = ssub.s32 2048, 2048
          %203 = vsyncadd %s197, %s202
          %s204 = smul.addr %s25, 16
          %s205 = sadd.s32 %s27, %s204
          %s206 = smul.addr %s205, 128
          %s207 = scalar_lea.hbm %s1, %s206
          %s208 = sshll.u32 %s200, 4
          %s209 = int_to_ptr.vmem [resolvable:$true] %s208
          %214 = dma.hbm_to_vmem [thread:$0]  %s207, 2048, %s209, %s197, 128, 128, 8
        $region24: #{tpu_custom_call.1} parent=15 // pred_fallthru
          _
        // Predicated region
        $region25: #{tpu_custom_call.1} parent=15 // pred_check
          %p215 = pneg %p115
        $region26: #{tpu_custom_call.1} parent=15 // pred_check_branch
          %217 = sbr.rel (%p215) target = $region28
        $region27: #{tpu_custom_call.1} parent=15 // pred_region
          %p218 = scmp.lt.s32.totalorder %s25, 2
          %s219 = scalar_select %p218, %s25, 2
          %p220 = scmp.lt.s32.totalorder %s27, 0
          %s221 = scalar_select %p220, %s27, 0
          %s222 = sadd.s32 %s221, %s219
          %s223 = scalar_lea.vmem %s2, %s222
        $region28: #{tpu_custom_call.1} parent=15 // pred_fallthru
          _
      $region16: #{tpu_custom_call.1} parent=5 // pred_fallthru
        _
      %p224 = scmp.le.s32.totalorder 1, %s18
      %p225 = scmp.lt.s32.totalorder %s18, 4
      %p226 = pnand %p224, %p225
      %p227 = pneg %p226
      // Predicated region
      $region29: #{tpu_custom_call.1} parent=5 // pred_check
        _
      $region30: #{tpu_custom_call.1} parent=5 // pred_check_branch
        %229 = sbr.rel (%p226) target = $region32
      $region31: #{tpu_custom_call.1} parent=5 // pred_region
        %s230 = ssub.s32 %s18, 1
        %s231 = sand.u32 %s52, 1
        %s232 = scalar_lea.sflag [#allocation3], %s231
        %s233 = sand.u32 %s52, 1
        %s234 = smul.addr %s233, 16
        %s235 = scalar_lea.vmem [#allocation2], %s234
        // Predicated region
        $region33: #{tpu_custom_call.1} parent=31 // pred_check
          %p236 = pneg %p65
        $region34: #{tpu_custom_call.1} parent=31 // pred_check_branch
          %238 = sbr.rel (%p236) target = $region36
        $region35: #{tpu_custom_call.1} parent=31 // pred_region
          %239 = dma.done %s232, 256
        $region36: #{tpu_custom_call.1} parent=31 // pred_fallthru
          _
        %s240 = sand.u32 %s80, 1
        %s241 = scalar_lea.sflag [#allocation6], %s240
        %s242 = sand.u32 %s80, 1
        %s243 = smul.addr %s242, 128
        %s244 = scalar_lea.vmem [#allocation5], %s243
        // Predicated region
        $region37: #{tpu_custom_call.1} parent=31 // pred_check
          %p245 = pneg %p93
        $region38: #{tpu_custom_call.1} parent=31 // pred_check_branch
          %247 = sbr.rel (%p245) target = $region40
        $region39: #{tpu_custom_call.1} parent=31 // pred_region
          %248 = dma.done %s241, 2048
        $region40: #{tpu_custom_call.1} parent=31 // pred_fallthru
          _
        %s249 = sand.u32 %s52, 1
        %s250 = scalar_lea.sflag [#allocation3], %s249
        %s251 = sand.u32 %s52, 1
        %s252 = smul.addr %s251, 16
        %s253 = scalar_lea.vmem [#allocation2], %s252
        %p254 = pneg %p65
        %p255 = pneg %p62
        %s256 = sand.u32 %s80, 1
        %s257 = scalar_lea.sflag [#allocation6], %s256
        %s258 = sand.u32 %s80, 1
        %s259 = smul.addr %s258, 128
        %s260 = scalar_lea.vmem [#allocation5], %s259
        %p261 = pneg %p93
        %p262 = pneg %p90
        %p263 = scmp.lt.s32.totalorder %s28, 2
        %s264 = scalar_select %p263, %s28, 2
        %p265 = scmp.lt.s32.totalorder %s30, 0
        %s266 = scalar_select %p265, %s30, 0
        %s267 = sadd.s32 %s266, %s264
        %s268 = scalar_lea.vmem %s2, %s267
        %p269 = pneg %p121
        %p270 = pneg %p118
        %p271 = pneg %p151
        %p272 = pneg %p148
        %s273 = sand.u32 %s138, 1
        %s274 = scalar_lea.sflag [#allocation4], %s273
        %s275 = sand.u32 %s138, 1
        %s276 = smul.addr %s275, 16
        %s277 = scalar_lea.vmem [#allocation7], %s276
        %s278 = smul.u32 2, %s29
        %p279 = scmp.lt.s32.totalorder %s28, 2
        %s280 = scalar_select %p279, %s28, 2
        %p281 = scmp.lt.s32.totalorder %s30, 0
        %s282 = scalar_select %p281, %s30, 0
        %s283 = sadd.s32 %s282, %s280
        %s284 = scalar_lea.vmem %s2, %s283
        %s285 = smul.u32 2, %s29
        %v286 = vld [vmem:[%s235] sm:$0xff]
        %v287 = vld [vmem:[%s235 + $0x8] sm:$0xff]
        %v288 = vld [vmem:[%s244] sm:$0xff]
        %v289 = vld [vmem:[%s244 + $0x8] sm:$0xff]
        %v290 = vld [vmem:[%s244 + $0x10] sm:$0xff]
        %v291 = vld [vmem:[%s244 + $0x18] sm:$0xff]
        %v292 = vld [vmem:[%s244 + $0x20] sm:$0xff]
        %v293 = vld [vmem:[%s244 + $0x28] sm:$0xff]
        %v294 = vld [vmem:[%s244 + $0x30] sm:$0xff]
        %v295 = vld [vmem:[%s244 + $0x38] sm:$0xff]
        %v296 = vld [vmem:[%s244 + $0x40] sm:$0xff]
        %v297 = vld [vmem:[%s244 + $0x48] sm:$0xff]
        %v298 = vld [vmem:[%s244 + $0x50] sm:$0xff]
        %v299 = vld [vmem:[%s244 + $0x58] sm:$0xff]
        %v300 = vld [vmem:[%s244 + $0x60] sm:$0xff]
        %v301 = vld [vmem:[%s244 + $0x68] sm:$0xff]
        %v302 = vld [vmem:[%s244 + $0x70] sm:$0xff]
        %v303 = vld [vmem:[%s244 + $0x78] sm:$0xff]
        %v304 = vld [vmem:[%s284] sm:$0x1]
        %v306 = vlaneseq
        %v307 = vshrl.u32 %v306, 7
        %v308 = vsub.s32 0, %v307
        %v309 = vrot.slane %v304, %v308
        %311 = vmatprep.subr.mxu0 0.0
        %312 = vmatpush1.msra.mxu0 %v303
        %313 = vmatprep.subr.mxu0 0.0
        %314 = vmatpush1.msra.mxu0 %v302
        %315 = vmatprep.subr.mxu0 0.0
        %316 = vmatpush1.msra.mxu0 %v301
        %317 = vmatprep.subr.mxu0 0.0
        %318 = vmatpush1.msra.mxu0 %v300
        %319 = vmatprep.subr.mxu0 0.0
        %320 = vmatpush1.msra.mxu0 %v299
        %321 = vmatprep.subr.mxu0 0.0
        %322 = vmatpush1.msra.mxu0 %v298
        %323 = vmatprep.subr.mxu0 0.0
        %324 = vmatpush1.msra.mxu0 %v297
        %325 = vmatprep.subr.mxu0 0.0
        %326 = vmatpush1.msra.mxu0 %v296
        %327 = vmatprep.subr.mxu0 0.0
        %328 = vmatpush1.msra.mxu0 %v295
        %329 = vmatprep.subr.mxu0 0.0
        %330 = vmatpush1.msra.mxu0 %v294
        %331 = vmatprep.subr.mxu0 0.0
        %332 = vmatpush1.msra.mxu0 %v293
        %333 = vmatprep.subr.mxu0 0.0
        %334 = vmatpush1.msra.mxu0 %v292
        %335 = vmatprep.subr.mxu0 0.0
        %336 = vmatpush1.msra.mxu0 %v291
        %337 = vmatprep.subr.mxu0 0.0
        %338 = vmatpush1.msra.mxu0 %v290
        %339 = vmatprep.subr.mxu0 0.0
        %340 = vmatpush1.msra.mxu0 %v289
        %341 = vmatprep.subr.mxu0 0.0
        %342 = vmatpush1.msra.mxu0 %v288
        %343 = vmatprep.subr.mxu0 0.0
        %344 = vmatpush2.msra.mxu0 0.0
        %345 = vmatprep.subr.mxu0 0.0
        %346 = vmatpush2.msra.mxu0 0.0
        %347 = vmatprep.subr.mxu0 0.0
        %348 = vmatpush2.msra.mxu0 0.0
        %349 = vmatprep.subr.mxu0 0.0
        %350 = vmatpush2.msra.mxu0 0.0
        %351 = vmatprep.subr.mxu0 0.0
        %352 = vmatpush2.msra.mxu0 0.0
        %353 = vmatprep.subr.mxu0 0.0
        %354 = vmatpush2.msra.mxu0 0.0
        %355 = vmatprep.subr.mxu0 0.0
        %356 = vmatpush2.msra.mxu0 0.0
        %357 = vmatprep.subr.mxu0 0.0
        %358 = vmatpush2.msra.mxu0 0.0
        %359 = vmatprep.subr.mxu0 0.0
        %360 = vmatpush2.msra.mxu0 0.0
        %361 = vmatprep.subr.mxu0 0.0
        %362 = vmatpush2.msra.mxu0 0.0
        %363 = vmatprep.subr.mxu0 0.0
        %364 = vmatpush2.msra.mxu0 0.0
        %365 = vmatprep.subr.mxu0 0.0
        %366 = vmatpush2.msra.mxu0 0.0
        %367 = vmatprep.subr.mxu0 0.0
        %368 = vmatpush2.msra.mxu0 0.0
        %369 = vmatprep.subr.mxu0 0.0
        %370 = vmatpush2.msra.mxu0 0.0
        %371 = vmatprep.subr.mxu0 0.0
        %372 = vmatpush2.msra.mxu0 0.0
        %373 = vmatprep.subr.mxu0 0.0
        %374 = vmatpush2.msra.mxu0 0.0
        %375 = vmatprep.mubr.f32.mxu0 0.0
        %376 = vmatmul.mubr.f32.gmra.mxu0 %v286
        %v377 = vpop.f32.mrf.mxu0
        %v378 = vadd.f32 %v309, %v377
        %v379 = vpop.f32.mrf.mxu0
        %380 = vmatprep.mubr.f32.mxu0 0.0
        %381 = vmatmul.mubr.f32.gmra.mxu0 %v287
        %v382 = vpop.f32.mrf.mxu0
        %v383 = vadd.f32 %v309, %v382
        %v384 = vpop.f32.mrf.mxu0
        %385 = vdwg.mxu0
        %386 = vst [vmem:[%s277] sm:$0xff] %v378
        %387 = vst [vmem:[%s277 + $0x8] sm:$0xff] %v383
        %s388 = sand.u32 %s138, 1
        %s389 = scalar_lea.sflag [#allocation4], %s388
        %s390 = sand.u32 %s138, 1
        %s391 = smul.addr %s390, 16
        %s392 = scalar_lea.vmem [#allocation7], %s391
        // Predicated region
        $region41: #{tpu_custom_call.1} parent=31 // pred_check
          %p393 = pneg %p148
        $region42: #{tpu_custom_call.1} parent=31 // pred_check_branch
          %395 = sbr.rel (%p393) target = $region44
        $region43: #{tpu_custom_call.1} parent=31 // pred_region
          %s396 = smul.u32 2, %s29
          %s398 = ssub.s32 256, 256
          %399 = vsyncadd %s389, %s398
          %s400 = sadd.s32 %s30, %s396
          %s401 = smul.addr %s28, 2
          %s402 = sadd.s32 %s400, %s401
          %s403 = smul.addr %s402, 128
          %s404 = scalar_lea.hbm %s3, %s403
          %s405 = sshll.u32 %s392, 4
          %s406 = int_to_ptr.vmem [resolvable:$true] %s405
          %411 = dma.vmem_to_hbm [thread:$0]  %s406, 256, %s404, %s389, 128, 128, 8
        $region44: #{tpu_custom_call.1} parent=31 // pred_fallthru
          _
      $region32: #{tpu_custom_call.1} parent=5 // pred_fallthru
        _
      %p412 = scmp.le.s32.totalorder 2, %s18
      // Predicated region
      $region45: #{tpu_custom_call.1} parent=5 // pred_check
        %p413 = pneg %p412
      $region46: #{tpu_custom_call.1} parent=5 // pred_check_branch
        %415 = sbr.rel (%p413) target = $region48
      $region47: #{tpu_custom_call.1} parent=5 // pred_region
        %s416 = ssub.s32 %s18, 2
        // Predicated region
        $region49: #{tpu_custom_call.1} parent=47 // pred_check
          %p417 = pneg %p154
        $region50: #{tpu_custom_call.1} parent=47 // pred_check_branch
          %419 = sbr.rel (%p417) target = $region52
        $region51: #{tpu_custom_call.1} parent=47 // pred_region
          %s420 = sand.u32 %s139, 1
          %s421 = scalar_lea.sflag [#allocation4], %s420
          %s422 = sand.u32 %s139, 1
          %s423 = smul.addr %s422, 16
          %s424 = scalar_lea.vmem [#allocation7], %s423
          %425 = dma.done %s421, 256
        $region52: #{tpu_custom_call.1} parent=47 // pred_fallthru
          _
      $region48: #{tpu_custom_call.1} parent=5 // pred_fallthru
        _
    $region6: #{tpu_custom_call.1} parent=1 // loop_footer
      %s22 = sadd.s32 1, %s18
    $region7: #{tpu_custom_call.1} parent=1 // loop_footer_branch
      %17 = sbr.rel target = $region3
    $region8: #{tpu_custom_call.1} parent=1 // loop_exit
      _
    %426 = vsyncpa [#allocation3], 1
    %s427 = scalar_lea.sflag [#allocation3], 1
    %428 = vsyncpa %s427, 1
    %429 = vsyncpa [#allocation6], 1
    %s430 = scalar_lea.sflag [#allocation6], 1
    %431 = vsyncpa %s430, 1
    %432 = vsyncpa [#allocation4], 1
    %s433 = scalar_lea.sflag [#allocation4], 1
    %434 = vsyncpa %s433, 1

</llo_original>
